<compile_context>
chip_gen: v7x
topology: tpu7x:2x2x1
jax: 0.10.0
libtpu: 0.0.40
codegen_flags: <defaults>
</compile_context>

<pallas_src>
import functools

import jax
import jax.numpy as jnp
from jax.experimental import pallas as pl
from jax.experimental.pallas import tpu as pltpu


_TILE_ELEMS = 512 * 1024            # ~2 MiB of f32 per x block
_MAX_LANE_TILE = 8192               # lanes per block (multiple of 128)
_ROW_GROUP = 32                     # rows per in-register partial (stats pass)
_VMEM_LIMIT = 32 * 1024 * 1024      # safe scoped-VMEM limit on v5e/v6e/v7x


def _round_down(a, b):
    return (a // b) * b


def _round_up(a, b):
    return ((a + b - 1) // b) * b


def _stats_kernel(x_ref, sum_ref, sumsq_ref, *, rows, full_params, last_params):
    """Accumulate per-row sum / sum-of-squares across the lane (HW) grid axis.

    full_params / last_params = (num_full_chunks, tail_width, tail_valid):
      * num_full_chunks 128-lane chunks are summed unmasked,
      * then a tail chunk of `tail_width` lanes with lanes >= tail_valid zeroed
        (tail_valid < tail_width only for the out-of-bounds remainder tile).
    """
    hwi = pl.program_id(1)

    @pl.when(hwi == 0)
    def _init():
        sum_ref[...] = jnp.zeros_like(sum_ref)
        sumsq_ref[...] = jnp.zeros_like(sumsq_ref)

    def accumulate(num_full, tail_w, tail_valid):
        for r0 in range(0, rows, _ROW_GROUP):
            rg = min(_ROW_GROUP, rows - r0)
            row_s = jnp.zeros((rg, 1), jnp.float32)
            row_q = jnp.zeros((rg, 1), jnp.float32)
            if num_full > 0:
                # In-register lane-chunk accumulation: 1 vld + 3 VALU per input
                # vreg, no accumulator stores in the hot loop.
                ps = x_ref[r0:r0 + rg, 0:128].astype(jnp.float32)
                pq = ps * ps
                for k in range(1, num_full):
                    xk = x_ref[r0:r0 + rg, k * 128:(k + 1) * 128].astype(jnp.float32)
                    ps = ps + xk
                    pq = pq + xk * xk
                row_s = jnp.sum(ps, axis=1, keepdims=True)     # XLU reduce
                row_q = jnp.sum(pq, axis=1, keepdims=True)
            if tail_w > 0:
                lo = num_full * 128
                xt = x_ref[r0:r0 + rg, lo:lo + tail_w].astype(jnp.float32)
                if tail_valid < tail_w:
                    # Out-of-bounds remainder lanes: zero them so the divisor
                    # stays the true N*H*W (applied in the wrapper).
                    lane = jax.lax.broadcasted_iota(jnp.int32, xt.shape, 1)
                    xt = jnp.where(lane < tail_valid, xt, 0.0)
                row_s = row_s + jnp.sum(xt, axis=1, keepdims=True)
                row_q = row_q + jnp.sum(xt * xt, axis=1, keepdims=True)
            # Outputs double as cross-lane-tile accumulators (resident in VMEM
            # across the hw grid axis); tiny RMW per row group per step.
            sum_ref[r0:r0 + rg, :] += row_s
            sumsq_ref[r0:r0 + rg, :] += row_q

    if last_params == full_params:
        accumulate(*full_params)
    else:
        last_idx = pl.num_programs(1) - 1

        @pl.when(hwi < last_idx)
        def _full_tiles():
            accumulate(*full_params)

        @pl.when(hwi == last_idx)
        def _remainder_tile():
            accumulate(*last_params)


def _apply_kernel(x_ref, scale_ref, shift_ref, o_ref):
    """y = x * scale[row] + shift[row]; scale/shift fold mean, inv_std, gamma, beta."""
    x = x_ref[...].astype(jnp.float32)
    o_ref[...] = (x * scale_ref[...] + shift_ref[...]).astype(o_ref.dtype)


def regular_batch_norm(x_nchw, weight, bias, eps=1e-5):
    """BatchNorm2d forward using training-mode (batch) statistics.

    Args:
      x_nchw: (N, C, H, W) array.
      weight: (C,) gamma.
      bias:   (C,) beta.
    Returns:
      (N, C, H, W) normalized output, same dtype as x.
    """
    n, c, h, w = x_nchw.shape
    hw = h * w
    r = n * c
    m = n * hw                                    # elements per channel

    # Free, contiguous view: rows = (batch, channel), lanes = spatial.
    x2 = x_nchw.reshape(r, hw)

    # ---- lane tiling --------------------------------------------------------
    thw = hw if hw <= _MAX_LANE_TILE else _MAX_LANE_TILE
    hw_tiles = pl.cdiv(hw, thw)

    num_full = thw // 128
    tail_w = thw % 128                            # nonzero only when hw_tiles == 1
    full_params = (num_full, tail_w, tail_w)
    rem = hw - (hw_tiles - 1) * thw               # valid lanes in the last tile
    if rem == thw:
        last_params = full_params
    else:
        tail_valid = rem % 128
        last_params = (rem // 128, 128 if tail_valid else 0, tail_valid)

    # ---- row tiling ---------------------------------------------------------
    row_cap = max(_round_down(max(_TILE_ELEMS // thw, 8), 8), 8)
    tr_apply = r if r <= row_cap else row_cap
    tr_stats = tr_apply
    if tr_stats == r and r >= 16 and r * hw >= (1 << 18):
        # Split rows into >=2 tiles so both v7x TensorCores join the stats pass.
        cand = _round_up(pl.cdiv(r, 2), 8)
        if cand < r:
            tr_stats = cand

    itemsize = x2.dtype.itemsize
    total = r * hw

    def x_spec(tr):
        return pl.BlockSpec((tr, thw), lambda ri, hwi: (ri, hwi))

    def row_spec(tr):
        return pl.BlockSpec((tr, 1), lambda ri, hwi: (ri, 0))

    # ---------------- phase 1: per-row sum / sum-of-squares ----------------
    stats_kernel = functools.partial(
        _stats_kernel, rows=tr_stats,
        full_params=full_params, last_params=last_params)
    s_rows, q_rows = pl.pallas_call(
        stats_kernel,
        out_shape=(jax.ShapeDtypeStruct((r, 1), jnp.float32),
                   jax.ShapeDtypeStruct((r, 1), jnp.float32)),
        grid_spec=pltpu.PrefetchScalarGridSpec(
            num_scalar_prefetch=0,
            grid=(pl.cdiv(r, tr_stats), hw_tiles),
            in_specs=[x_spec(tr_stats)],
            out_specs=[row_spec(tr_stats), row_spec(tr_stats)]),
        compiler_params=pltpu.CompilerParams(
            dimension_semantics=("parallel", "arbitrary"),
            vmem_limit_bytes=_VMEM_LIMIT),
        cost_estimate=pl.CostEstimate(
            flops=3 * total, transcendentals=0,
            bytes_accessed=total * itemsize + 2 * r * 4),
    )(x2)

    # ---- tiny per-channel finalize (C-length arrays; negligible traffic) ----
    s_c = jnp.sum(s_rows.reshape(n, c), axis=0)
    q_c = jnp.sum(q_rows.reshape(n, c), axis=0)
    mean = s_c / m
    # Single-pass (biased, training-mode) variance in f32, clamped at 0.
    # TODO(synk): switch to a shifted/two-pass variant if tight parity is
    #             needed for |mean| >> std channels (cancellation).
    var = jnp.maximum(q_c / m - mean * mean, 0.0)
    scale_c = weight.astype(jnp.float32) * jax.lax.rsqrt(var + eps)
    shift_c = bias.astype(jnp.float32) - mean * scale_c
    scale_r = jnp.broadcast_to(scale_c[None, :], (n, c)).reshape(r, 1)
    shift_r = jnp.broadcast_to(shift_c[None, :], (n, c)).reshape(r, 1)

    # ---------------- phase 2: normalize + affine ----------------
    out2 = pl.pallas_call(
        _apply_kernel,
        out_shape=jax.ShapeDtypeStruct((r, hw), x2.dtype),
        grid_spec=pltpu.PrefetchScalarGridSpec(
            num_scalar_prefetch=0,
            grid=(pl.cdiv(r, tr_apply), hw_tiles),
            in_specs=[x_spec(tr_apply), row_spec(tr_apply), row_spec(tr_apply)],
            out_specs=x_spec(tr_apply)),
        compiler_params=pltpu.CompilerParams(
            dimension_semantics=("parallel", "parallel"),
            vmem_limit_bytes=_VMEM_LIMIT),
        cost_estimate=pl.CostEstimate(
            flops=2 * total, transcendentals=0,
            bytes_accessed=2 * total * itemsize + 2 * r * 4),
    )(x2, scale_r, shift_r)

    return out2.reshape(n, c, h, w)


def _reference(x, weight, bias, eps=1e-5):
    mean = jnp.mean(x, axis=(0, 2, 3), keepdims=True)
    var = jnp.mean((x - mean) ** 2, axis=(0, 2, 3), keepdims=True)
    c = x.shape[1]
    return (x - mean) / jnp.sqrt(var + eps) * weight.reshape(1, c, 1, 1) \
        + bias.reshape(1, c, 1, 1)


if __name__ == "__main__":
    key = jax.random.PRNGKey(0)
    N, C, H, W = 2, 4, 16, 16
    kx, kw, kb = jax.random.split(key, 3)
    x = jax.random.normal(kx, (N, C, H, W), dtype=jnp.float32)

    # PyTorch nn.BatchNorm2d default parameter init (gamma=1, beta=0).
    weight = jnp.ones((C,), dtype=jnp.float32)
    bias = jnp.zeros((C,), dtype=jnp.float32)

    out = jax.block_until_ready(regular_batch_norm(x, weight, bias, eps=1e-5))
    assert out.shape == (N, C, H, W)
    assert jnp.max(jnp.abs(out - _reference(x, weight, bias))) < 1e-4

    # Non-trivial gamma/beta.
    weight2 = 1.0 + 0.1 * jax.random.normal(kw, (C,), dtype=jnp.float32)
    bias2 = 0.1 * jax.random.normal(kb, (C,), dtype=jnp.float32)
    out2 = jax.block_until_ready(regular_batch_norm(x, weight2, bias2, eps=1e-5))
    assert jnp.max(jnp.abs(out2 - _reference(x, weight2, bias2))) < 1e-4

    # Odd, non-128-multiple spatial size exercises the in-bounds tail path.
    x_odd = jax.random.normal(key, (2, 3, 5, 7), dtype=jnp.float32)
    w_odd = jnp.ones((3,), dtype=jnp.float32)
    b_odd = jnp.zeros((3,), dtype=jnp.float32)
    out3 = jax.block_until_ready(regular_batch_norm(x_odd, w_odd, b_odd, eps=1e-5))
    assert jnp.max(jnp.abs(out3 - _reference(x_odd, w_odd, b_odd))) < 1e-4

    print("KERNEL_OK")
</pallas_src>

<mosaic_0001>
module attributes {stable_mosaic.version = 11 : i64} {
  func.func @_stats_kernel(%arg0: i32, %arg1: i32, %arg2: memref<8x256xf32, #tpu.memory_space<vmem>>, %arg3: memref<8x1xf32, #tpu.memory_space<vmem>>, %arg4: memref<8x1xf32, #tpu.memory_space<vmem>>) attributes {dimension_semantics = [#tpu.dimension_semantics<parallel>, #tpu.dimension_semantics<arbitrary>], iteration_bounds = array<i64: 1, 1>, scalar_prefetch = 0 : i64, scratch_operands = 0 : i64, tpu.core_type = #tpu.core_type<tc>, window_params = [{transform_indices = @transform_0, window_bounds = array<i64: 8, 256>}, {transform_indices = @transform_1, window_bounds = array<i64: 8, 1>}, {transform_indices = @transform_2, window_bounds = array<i64: 8, 1>}]} {
    %c0_i32 = arith.constant 0 : i32
    %0 = arith.cmpi eq, %arg1, %c0_i32 : i32
    %1 = arith.extui %0 : i1 to i32
    %c0_i32_0 = arith.constant 0 : i32
    %2 = arith.cmpi ne, %1, %c0_i32_0 : i32
    scf.if %2 {
      %cst_12 = arith.constant 0.000000e+00 : f32
      %19 = vector.broadcast %cst_12 : f32 to vector<8x1xf32>
      %c0_13 = arith.constant 0 : index
      %c0_14 = arith.constant 0 : index
      %20 = vector.load %arg3[%c0_13, %c0_14] : memref<8x1xf32, #tpu.memory_space<vmem>>, vector<8x1xf32>
      tpu.vector_store %arg3[%c0_13, %c0_14], %19 {strides = array<i32>} : memref<8x1xf32, #tpu.memory_space<vmem>>, vector<8x1xf32>,
      %cst_15 = arith.constant 0.000000e+00 : f32
      %21 = vector.broadcast %cst_15 : f32 to vector<8x1xf32>
      %c0_16 = arith.constant 0 : index
      %c0_17 = arith.constant 0 : index
      %22 = vector.load %arg4[%c0_16, %c0_17] : memref<8x1xf32, #tpu.memory_space<vmem>>, vector<8x1xf32>
      tpu.vector_store %arg4[%c0_16, %c0_17], %21 {strides = array<i32>} : memref<8x1xf32, #tpu.memory_space<vmem>>, vector<8x1xf32>,
    } else {
    }
    %c0 = arith.constant 0 : index
    %c0_1 = arith.constant 0 : index
    %3 = vector.load %arg2[%c0, %c0_1] : memref<8x256xf32, #tpu.memory_space<vmem>>, vector<8x128xf32>
    %4 = arith.mulf %3, %3 : vector<8x128xf32>
    %c0_2 = arith.constant 0 : index
    %c128 = arith.constant 128 : index
    %5 = vector.load %arg2[%c0_2, %c128] : memref<8x256xf32, #tpu.memory_space<vmem>>, vector<8x128xf32>
    %6 = arith.addf %3, %5 : vector<8x128xf32>
    %7 = arith.mulf %5, %5 : vector<8x128xf32>
    %8 = arith.addf %4, %7 : vector<8x128xf32>
    %cst = arith.constant dense<0.000000e+00> : vector<8xf32>
    %9 = vector.multi_reduction <add>, %6, %cst [1] : vector<8x128xf32> to vector<8xf32>
    %10 = vector.shape_cast %9 : vector<8xf32> to vector<8x1xf32>
    %cst_3 = arith.constant dense<0.000000e+00> : vector<8xf32>
    %11 = vector.multi_reduction <add>, %8, %cst_3 [1] : vector<8x128xf32> to vector<8xf32>
    %12 = vector.shape_cast %11 : vector<8xf32> to vector<8x1xf32>
    %c0_4 = arith.constant 0 : index
    %c0_5 = arith.constant 0 : index
    %13 = vector.load %arg3[%c0_4, %c0_5] : memref<8x1xf32, #tpu.memory_space<vmem>>, vector<8x1xf32>
    %14 = arith.addf %13, %10 : vector<8x1xf32>
    %c0_6 = arith.constant 0 : index
    %c0_7 = arith.constant 0 : index
    %15 = vector.load %arg3[%c0_6, %c0_7] : memref<8x1xf32, #tpu.memory_space<vmem>>, vector<8x1xf32>
    tpu.vector_store %arg3[%c0_6, %c0_7], %14 {strides = array<i32>} : memref<8x1xf32, #tpu.memory_space<vmem>>, vector<8x1xf32>,
    %c0_8 = arith.constant 0 : index
    %c0_9 = arith.constant 0 : index
    %16 = vector.load %arg4[%c0_8, %c0_9] : memref<8x1xf32, #tpu.memory_space<vmem>>, vector<8x1xf32>
    %17 = arith.addf %16, %12 : vector<8x1xf32>
    %c0_10 = arith.constant 0 : index
    %c0_11 = arith.constant 0 : index
    %18 = vector.load %arg4[%c0_10, %c0_11] : memref<8x1xf32, #tpu.memory_space<vmem>>, vector<8x1xf32>
    tpu.vector_store %arg4[%c0_10, %c0_11], %17 {strides = array<i32>} : memref<8x1xf32, #tpu.memory_space<vmem>>, vector<8x1xf32>,
    return
  }
  func.func @transform_0(%arg0: i32, %arg1: i32) -> (i32, i32) {
    %c0_i32 = arith.constant 0 : i32
    return %arg0, %arg1 : i32, i32
  }
  func.func @transform_1(%arg0: i32, %arg1: i32) -> (i32, i32) {
    %c0_i32 = arith.constant 0 : i32
    %c0_i32_0 = arith.constant 0 : i32
    return %arg0, %c0_i32 : i32, i32
  }
  func.func @transform_2(%arg0: i32, %arg1: i32) -> (i32, i32) {
    %c0_i32 = arith.constant 0 : i32
    %c0_i32_0 = arith.constant 0 : i32
    return %arg0, %c0_i32 : i32, i32
  }
}

</mosaic_0001>

<llo_original>
// kernel: tpu_custom_call.1
$region0: #{tpu_custom_call.1}
  #allocation0 [shape = 'u32[]', space=smem, size = 0x4, offset = 0x4, fixed_abs, tag = 'smem constant byte address 0x4 - core index']
  #allocation1 [shape = 'u32[144,128]{1,0:T(1,128)}', space=vmem, size = 0x12000, scoped, tag = 'internal scratch']
  %s0 = inlined_call_operand.hbm [shape: f32[8,256], index: 0, kind: input, shape index: {}]
  %s1 = inlined_call_operand.vmem [shape: f32[8,1], index: 1, kind: output, shape index: {0}]
  %s2 = inlined_call_operand.vmem [shape: f32[8,1], index: 2, kind: output, shape index: {1}]
  %3 = xla_tuple %s1, %s2
  %s4 = sld [smem:[#allocation0]]
  $region30: #{tpu_custom_call.1} parent=0
    _
  %s6 = ssub.s32 1, %s4
  %s7 = scalar_select 0, %s6, %s4
  $region1: #{tpu_custom_call.1} parent=0
    #allocation2 [shape = 'u8[8192]{0}', space=vmem, size = 0x2000, scoped, tag = 'input window, operand 0, single buffered']
    #allocation3 [shape = 's32[1]{0}', space=sflag, size = 0x4, scoped, tag = 'scoped memory for tpu_custom_call.1']
    %8 = vsyncpa [#allocation3], 0
    // Predicated region
    $region2: #{tpu_custom_call.1} parent=1 // pred_check
      _
    $region3: #{tpu_custom_call.1} parent=1 // pred_check_branch
      %10 = sbr.rel (0) target = $region5
    $region4: #{tpu_custom_call.1} parent=1 // pred_region
      %s12 = ssub.s32 256, 256
      %13 = vsyncadd [#allocation3], %s12
      %s15 = sshll.u32 [#allocation2], 4
      %s16 = int_to_ptr.vmem [resolvable:$true] %s15
      %18 = dma.hbm_to_vmem [thread:$0]  %s0, 256, %s16, [#allocation3]
    $region5: #{tpu_custom_call.1} parent=1 // pred_fallthru
      _
    // Predicated region
    $region6: #{tpu_custom_call.1} parent=1 // pred_check
      _
    $region7: #{tpu_custom_call.1} parent=1 // pred_check_branch
      %20 = sbr.rel (0) target = $region9
    $region8: #{tpu_custom_call.1} parent=1 // pred_region
      %21 = dma.done [#allocation3], 256
    $region9: #{tpu_custom_call.1} parent=1 // pred_fallthru
      _
    %p22 = scmp.eq.s32.totalorder 0, 0
    // Predicated region
    $region10: #{tpu_custom_call.1} parent=1 // pred_check
      %p23 = pneg %p22
    $region11: #{tpu_custom_call.1} parent=1 // pred_check_branch
      %25 = sbr.rel (%p23) target = $region13
    $region12: #{tpu_custom_call.1} parent=1 // pred_region
      %vm26 = vcmask 7168
      %27 = vst.msk [vmem:[%s1] sm:$0xff] %vm26, 0.0
      %28 = vst.msk [vmem:[%s2] sm:$0xff] %vm26, 0.0
    $region13: #{tpu_custom_call.1} parent=1 // pred_fallthru
      _
    %v29 = vld [vmem:[#allocation2] sm:$0xff]
    %v30 = vmul.f32 %v29, %v29
    %v31 = vld [vmem:[#allocation2 + $0x8] sm:$0xff]
    %v32 = vadd.f32 %v29, %v31
    %v33 = vmul.f32 %v31, %v31
    %v34 = vadd.f32 %v30, %v33
    %35 = vadd.xlane.f32.xlu0 %v32
    %v36 = vpop.xlane.xlu0 %35
    %37 = vadd.xlane.f32.xlu0 %v34
    %v38 = vpop.xlane.xlu0 %37
    %v39 = vld [vmem:[%s1] sm:$0xff]
    %v40 = vadd.f32 %v39, %v36
    %vm41 = vcmask 7168
    %42 = vst.msk [vmem:[%s1] sm:$0xff] %vm41, %v40
    %v43 = vld [vmem:[%s2] sm:$0xff]
    %v44 = vadd.f32 %v43, %v38
    %45 = vst.msk [vmem:[%s2] sm:$0xff] %vm41, %v44
    // Predicated region
    $region14: #{tpu_custom_call.1} parent=1 // pred_check
      _
    $region15: #{tpu_custom_call.1} parent=1 // pred_check_branch
      %47 = sbr.rel (0) target = $region17
    $region16: #{tpu_custom_call.1} parent=1 // pred_region
      _
    $region17: #{tpu_custom_call.1} parent=1 // pred_fallthru
      _
    // Predicated region
    $region18: #{tpu_custom_call.1} parent=1 // pred_check
      _
    $region19: #{tpu_custom_call.1} parent=1 // pred_check_branch
      %49 = sbr.rel (0) target = $region21
    $region20: #{tpu_custom_call.1} parent=1 // pred_region
      _
    $region21: #{tpu_custom_call.1} parent=1 // pred_fallthru
      _
    // Predicated region
    $region22: #{tpu_custom_call.1} parent=1 // pred_check
      _
    $region23: #{tpu_custom_call.1} parent=1 // pred_check_branch
      %51 = sbr.rel (0) target = $region25
    $region24: #{tpu_custom_call.1} parent=1 // pred_region
      _
    $region25: #{tpu_custom_call.1} parent=1 // pred_fallthru
      _
    // Predicated region
    $region26: #{tpu_custom_call.1} parent=1 // pred_check
      _
    $region27: #{tpu_custom_call.1} parent=1 // pred_check_branch
      %53 = sbr.rel (0) target = $region29
    $region28: #{tpu_custom_call.1} parent=1 // pred_region
      _
    $region29: #{tpu_custom_call.1} parent=1 // pred_fallthru
      _
    %54 = vsyncpa [#allocation3], 1

</llo_original>
